<compile_context>
chip_gen: v7x
topology: tpu7x:2x2x1
jax: 0.10.0
libtpu: 0.0.40
codegen_flags: <defaults>
</compile_context>

<pallas_src>
import functools

import jax
import jax.numpy as jnp
import numpy as np
from jax.experimental import pallas as pl
from jax.experimental.pallas import tpu as pltpu


def _round_up(x, m):
    return (x + m - 1) // m * m


def _cdiv(a, b):
    return -(-a // b)


# VMEM budget for the double-buffered prediction input block (the dominant
# term once the accumulators are narrow).  Conservative for v7x (64 MiB VMEM).
_PRED_VMEM_BUDGET = 8 * 1024 * 1024


def _choose_tiling(C, HW, pred_bytes, hw_tile_target):
    """Returns (hw_tile, inner, num_tiles) with hw_tile = k*inner, inner%128==0."""
    # Inner lane chunk: keep (C, inner) f32 intermediates register-resident
    # (~<= 2K elements per live value for small/medium C).
    inner = max(128, min(512, ((2048 // max(C, 1)) // 128) * 128))
    inner = min(inner, _round_up(HW, 128), _round_up(hw_tile_target, 128))
    hw_units = _cdiv(HW, inner)
    # Outer tile (the DMA block): big to amortize the ~0.35us per-grid-step
    # overhead, bounded by the VMEM budget and by the unrolled-loop length.
    budget_units = max(1, _PRED_VMEM_BUDGET // (2 * C * pred_bytes * inner))
    max_units = max(1, min(_round_up(hw_tile_target, 128) // inner,
                           budget_units, 32))
    tile_units = min(max_units, hw_units)
    num_tiles = _cdiv(hw_units, tile_units)
    tile_units = _cdiv(hw_units, num_tiles)      # rebalance -> minimal padding
    return tile_units * inner, inner, num_tiles


def _lane_fold(x, chunks):
    """Sum the 128-lane chunks of a (C, chunks*128) value down to (C, 128).

    Static slices land exactly on vreg lane-tile boundaries (no data movement);
    the pairwise tree is pure VALU vreg adds (no XLU, no VMEM traffic).
    """
    parts = [x[:, k * 128:(k + 1) * 128] for k in range(chunks)]
    while len(parts) > 1:
        nxt = [parts[i] + parts[i + 1] for i in range(0, len(parts) - 1, 2)]
        if len(parts) % 2:
            nxt.append(parts[-1])
        parts = nxt
    return parts[0]


def _tversky_kernel(p_ref, t_ref, inter_ref, sm_ref, oh_ref, *,
                    ignore_index, num_classes, inner, tile_units):
    s = pl.program_id(1)
    chunks = inner // 128

    acc_i = jnp.zeros((num_classes, 128), jnp.float32)
    acc_s = jnp.zeros((num_classes, 128), jnp.float32)
    acc_o = jnp.zeros((num_classes, 128), jnp.float32)

    # Static (fully unrolled) loop over register-sized lane chunks of the tile.
    for k in range(tile_units):
        lo = k * inner
        p = p_ref[0, :, lo:lo + inner].astype(jnp.float32)     # (C, inner)
        t = t_ref[0, :, lo:lo + inner]                         # (1, inner) i32

        # Numerically-stable softmax over the class (sublane) axis.
        m = jnp.max(p, axis=0, keepdims=True)
        e = jnp.exp(p - m)
        d = jnp.sum(e, axis=0, keepdims=True)
        r = pl.reciprocal(d, approx=True)
        r = r * (2.0 - d * r)            # one Newton step: ~1e-7 rel. error
        sm = e * r                       # (C, inner)

        # One-hot via compare against a class-id iota (== PyTorch scatter_ +
        # mask-zeroing).  Padded pixels carry target id C -> never match.
        cls = jax.lax.broadcasted_iota(jnp.int32, sm.shape, 0)
        oh = cls == t
        if ignore_index is not None and 0 <= ignore_index < num_classes:
            # Only needed when ignore_index can collide with a real class id.
            oh = jnp.logical_and(oh, t != ignore_index)

        acc_i = acc_i + _lane_fold(jnp.where(oh, sm, 0.0), chunks)   # TP
        acc_s = acc_s + _lane_fold(sm, chunks)                       # sum(sm)
        acc_o = acc_o + _lane_fold(oh.astype(jnp.float32), chunks)   # sum(1hot)

    # One narrow (C, 128) read-modify-write per quantity per grid step.  The
    # output block is resident across the (arbitrary) spatial axis and written
    # back to HBM once per image.
    @pl.when(s == 0)
    def _():
        inter_ref[0] = acc_i
        sm_ref[0] = acc_s
        oh_ref[0] = acc_o

    @pl.when(s > 0)
    def _():
        inter_ref[0] += acc_i
        sm_ref[0] += acc_s
        oh_ref[0] += acc_o


def tversky_loss_2d(predictions, targets, *, alpha=0.4, beta=0.6, weight=None,
                    ignore_index=-100, hw_tile_target=8192):
    """predictions: [N, C, H, W] (any float dtype); targets: [N, H, W] int."""
    N, C, H, W = predictions.shape
    HW = H * W
    pred_bytes = jnp.dtype(predictions.dtype).itemsize

    hw_tile, inner, num_tiles = _choose_tiling(C, HW, pred_bytes, hw_tile_target)
    tile_units = hw_tile // inner
    hw_pad = hw_tile * num_tiles

    p = predictions.reshape(N, C, HW)                 # stream in native dtype
    t = targets.reshape(N, 1, HW).astype(jnp.int32)
    if hw_pad != HW:
        # Zero-pad logits (exactly uniform softmax, corrected analytically in
        # the epilogue) and pad targets with the out-of-range class id C so the
        # one-hot never fires: keeps the per-step hot path free of lane masks.
        p = jnp.pad(p, ((0, 0), (0, 0), (0, hw_pad - HW)))
        t = jnp.pad(t, ((0, 0), (0, 0), (0, hw_pad - HW)), constant_values=C)

    kernel = functools.partial(
        _tversky_kernel, ignore_index=ignore_index, num_classes=C,
        inner=inner, tile_units=tile_units)

    part = jax.ShapeDtypeStruct((N, C, 128), jnp.float32)
    inter_p, sm_p, oh_p = pl.pallas_call(
        kernel,
        out_shape=(part, part, part),
        grid_spec=pltpu.PrefetchScalarGridSpec(
            num_scalar_prefetch=0,
            grid=(N, num_tiles),                      # spatial tiles innermost
            in_specs=[
                pl.BlockSpec((1, C, hw_tile), lambda n, s: (n, 0, s)),
                pl.BlockSpec((1, 1, hw_tile), lambda n, s: (n, 0, s)),
            ],
            out_specs=[
                pl.BlockSpec((1, C, 128), lambda n, s: (n, 0, 0)),
                pl.BlockSpec((1, C, 128), lambda n, s: (n, 0, 0)),
                pl.BlockSpec((1, C, 128), lambda n, s: (n, 0, 0)),
            ],
        ),
        compiler_params=pltpu.CompilerParams(
            # Batch parallel (v7x megacore works on disjoint images), spatial
            # axis is the resident-output reduction.
            dimension_semantics=("parallel", "arbitrary"),
            # Actual use is <= ~10 MiB by construction; 48 MiB stays under
            # v7x's 64 MiB physical VMEM while unblocking large tiles.
            vmem_limit_bytes=48 * 1024 * 1024),
    )(p, t)

    # Tiny final reduction + Tversky formula in plain JAX.
    smooth = 1.0
    inter = inter_p.sum(axis=(0, 2))                  # (C,)  TP
    sum_sm = sm_p.sum(axis=(0, 2))                    # (C,)
    sum_oh = oh_p.sum(axis=(0, 2))                    # (C,)
    if hw_pad != HW:
        # Padded pixels have all-zero logits -> exactly uniform softmax 1/C.
        sum_sm = sum_sm - (N * (hw_pad - HW)) / C
    fp = sum_sm - inter        # == sum(sm * (1 - onehot))
    fn = sum_oh - inter        # == sum((1 - sm) * onehot)
    num = inter + smooth
    denom = num + alpha * fp + beta * fn
    w = 1.0 if weight is None else weight
    # NOTE: can be inf/NaN for a class with no GT pixels and no predicted mass;
    # this faithfully matches the reference formula.
    # TODO(synk): the reference's `denominator[mask] = 0` indexes a [C] tensor
    # with an [N,C,H,W] boolean mask (shape-invalid in PyTorch); omitted here.
    loss_per_channel = w * (1.0 - num / (denom - num))
    return jnp.sum(loss_per_channel) / C


def _reference_loss(p, t, *, alpha=0.4, beta=0.6, ignore_index=-100):
    """Pure-JAX replica of the PyTorch forward (sans the shape-invalid line)."""
    smooth = 1.0
    C = p.shape[1]
    sm = jax.nn.softmax(p.astype(jnp.float32), axis=1)
    mask = t == ignore_index
    tc = jnp.where(mask, 0, t)
    onehot = jax.nn.one_hot(tc, C, axis=1, dtype=jnp.float32)
    onehot = jnp.where(mask[:, None, :, :], 0.0, onehot)
    inter = sm * onehot
    numerator = inter.sum(axis=(0, 2, 3)) + smooth
    item1 = sm * (1.0 - onehot)
    item2 = (1.0 - sm) * onehot
    denominator = (numerator + alpha * item1.sum(axis=(0, 2, 3))
                   + beta * item2.sum(axis=(0, 2, 3)))
    loss_per_channel = 1.0 * (1.0 - numerator / (denominator - numerator))
    return loss_per_channel.sum() / C


if __name__ == "__main__":
    key = jax.random.PRNGKey(0)
    k1, k2, k3, k4, k5, k6 = jax.random.split(key, 6)

    # Test 1: float32, single spatial tile, ignore_index (-100) pixels present.
    N, C, H, W = 2, 4, 16, 16
    predictions = jax.random.normal(k1, (N, C, H, W), dtype=jnp.float32)
    targets = jax.random.randint(k2, (N, H, W), 0, C, dtype=jnp.int32)
    targets = targets.at[0, :2, :3].set(-100)
    loss = tversky_loss_2d(predictions, targets)
    jax.block_until_ready(loss)
    ref = _reference_loss(predictions, targets)
    np.testing.assert_allclose(np.asarray(loss), np.asarray(ref),
                               rtol=1e-5, atol=2e-6)

    # Test 2: bf16 streaming, multi-tile grid + padded (ragged) spatial axis.
    N2, C2, H2, W2 = 2, 4, 16, 12        # HW = 192 -> 2 tiles of 128, 64 padded
    predictions2 = jax.random.normal(k3, (N2, C2, H2, W2), dtype=jnp.bfloat16)
    targets2 = jax.random.randint(k4, (N2, H2, W2), 0, C2, dtype=jnp.int32)
    targets2 = targets2.at[1, :3, :2].set(-100)
    loss2 = tversky_loss_2d(predictions2, targets2, hw_tile_target=128)
    jax.block_until_ready(loss2)
    ref2 = _reference_loss(predictions2, targets2)
    np.testing.assert_allclose(np.asarray(loss2), np.asarray(ref2),
                               rtol=1e-4, atol=1e-5)

    # Test 3: odd class count, in-range ignore_index, padded single tile.
    N3, C3, H3, W3 = 2, 3, 24, 20        # HW = 480 -> one 512-lane tile
    predictions3 = jax.random.normal(k5, (N3, C3, H3, W3), dtype=jnp.float32)
    targets3 = jax.random.randint(k6, (N3, H3, W3), 0, C3, dtype=jnp.int32)
    loss3 = tversky_loss_2d(predictions3, targets3, ignore_index=1)
    jax.block_until_ready(loss3)
    ref3 = _reference_loss(predictions3, targets3, ignore_index=1)
    np.testing.assert_allclose(np.asarray(loss3), np.asarray(ref3),
                               rtol=1e-5, atol=2e-6)

    print("KERNEL_OK")
</pallas_src>

<mosaic_0001>
module attributes {stable_mosaic.version = 11 : i64} {
  func.func @_tversky_kernel(%arg0: i32, %arg1: i32, %arg2: memref<1x4x256xf32, #tpu.memory_space<vmem>>, %arg3: memref<1x1x256xi32, #tpu.memory_space<vmem>>, %arg4: memref<1x4x128xf32, #tpu.memory_space<vmem>>, %arg5: memref<1x4x128xf32, #tpu.memory_space<vmem>>, %arg6: memref<1x4x128xf32, #tpu.memory_space<vmem>>) attributes {dimension_semantics = [#tpu.dimension_semantics<parallel>, #tpu.dimension_semantics<arbitrary>], iteration_bounds = array<i64: 2, 1>, scalar_prefetch = 0 : i64, scratch_operands = 0 : i64, tpu.core_type = #tpu.core_type<tc>, window_params = [{transform_indices = @transform_0, window_bounds = array<i64: 1, 4, 256>}, {transform_indices = @transform_1, window_bounds = array<i64: 1, 1, 256>}, {transform_indices = @transform_2, window_bounds = array<i64: 1, 4, 128>}, {transform_indices = @transform_3, window_bounds = array<i64: 1, 4, 128>}, {transform_indices = @transform_4, window_bounds = array<i64: 1, 4, 128>}]} {
    %cst = arith.constant 0.000000e+00 : f32
    %0 = vector.broadcast %cst : f32 to vector<4x128xf32>
    %cst_0 = arith.constant 0.000000e+00 : f32
    %1 = vector.broadcast %cst_0 : f32 to vector<4x128xf32>
    %cst_1 = arith.constant 0.000000e+00 : f32
    %2 = vector.broadcast %cst_1 : f32 to vector<4x128xf32>
    %c0 = arith.constant 0 : index
    %c0_2 = arith.constant 0 : index
    %c0_3 = arith.constant 0 : index
    %3 = vector.load %arg2[%c0, %c0_2, %c0_3] : memref<1x4x256xf32, #tpu.memory_space<vmem>>, vector<1x4x256xf32>
    %4 = vector.shape_cast %3 : vector<1x4x256xf32> to vector<4x256xf32>
    %c0_4 = arith.constant 0 : index
    %c0_5 = arith.constant 0 : index
    %c0_6 = arith.constant 0 : index
    %5 = vector.load %arg3[%c0_4, %c0_5, %c0_6] : memref<1x1x256xi32, #tpu.memory_space<vmem>>, vector<1x1x256xi32>
    %6 = vector.shape_cast %5 : vector<1x1x256xi32> to vector<1x256xi32>
    %cst_7 = arith.constant dense<0xFF800000> : vector<256xf32>
    %7 = vector.multi_reduction <maximumf>, %4, %cst_7 [0] : vector<4x256xf32> to vector<256xf32>
    %8 = vector.shape_cast %7 : vector<256xf32> to vector<1x256xf32>
    %9 = vector.broadcast %8 : vector<1x256xf32> to vector<4x256xf32>
    %10 = arith.subf %4, %9 : vector<4x256xf32>
    %11 = math.exp %10 : vector<4x256xf32>
    %cst_8 = arith.constant dense<0.000000e+00> : vector<256xf32>
    %12 = vector.multi_reduction <add>, %11, %cst_8 [0] : vector<4x256xf32> to vector<256xf32>
    %13 = vector.shape_cast %12 : vector<256xf32> to vector<1x256xf32>
    %14 = tpu.reciprocal %13 {approx = true} : vector<1x256xf32> -> vector<1x256xf32>
    %15 = arith.mulf %13, %14 : vector<1x256xf32>
    %cst_9 = arith.constant 2.000000e+00 : f32
    %16 = vector.broadcast %cst_9 : f32 to vector<1x256xf32>
    %17 = arith.subf %16, %15 : vector<1x256xf32>
    %18 = arith.mulf %14, %17 : vector<1x256xf32>
    %19 = vector.broadcast %18 : vector<1x256xf32> to vector<4x256xf32>
    %20 = arith.mulf %11, %19 : vector<4x256xf32>
    %21 = tpu.iota {dimensions = array<i32: 0>} : vector<4x256xi32>
    %22 = vector.broadcast %6 : vector<1x256xi32> to vector<4x256xi32>
    %23 = arith.cmpi eq, %21, %22 : vector<4x256xi32>
    %cst_10 = arith.constant 0.000000e+00 : f32
    %24 = vector.broadcast %cst_10 : f32 to vector<4x256xf32>
    %25 = arith.select %23, %20, %24 : vector<4x256xi1>, vector<4x256xf32>
    %26 = vector.extract_strided_slice %25 {offsets = [0, 0], sizes = [4, 128], strides = [1, 1]} : vector<4x256xf32> to vector<4x128xf32>
    %27 = vector.extract_strided_slice %25 {offsets = [0, 128], sizes = [4, 128], strides = [1, 1]} : vector<4x256xf32> to vector<4x128xf32>
    %28 = arith.addf %26, %27 : vector<4x128xf32>
    %29 = arith.addf %0, %28 : vector<4x128xf32>
    %30 = vector.extract_strided_slice %20 {offsets = [0, 0], sizes = [4, 128], strides = [1, 1]} : vector<4x256xf32> to vector<4x128xf32>
    %31 = vector.extract_strided_slice %20 {offsets = [0, 128], sizes = [4, 128], strides = [1, 1]} : vector<4x256xf32> to vector<4x128xf32>
    %32 = arith.addf %30, %31 : vector<4x128xf32>
    %33 = arith.addf %1, %32 : vector<4x128xf32>
    %34 = arith.extui %23 : vector<4x256xi1> to vector<4x256xi32>
    %35 = arith.sitofp %34 : vector<4x256xi32> to vector<4x256xf32>
    %36 = vector.extract_strided_slice %35 {offsets = [0, 0], sizes = [4, 128], strides = [1, 1]} : vector<4x256xf32> to vector<4x128xf32>
    %37 = vector.extract_strided_slice %35 {offsets = [0, 128], sizes = [4, 128], strides = [1, 1]} : vector<4x256xf32> to vector<4x128xf32>
    %38 = arith.addf %36, %37 : vector<4x128xf32>
    %39 = arith.addf %2, %38 : vector<4x128xf32>
    %c0_i32 = arith.constant 0 : i32
    %40 = arith.cmpi eq, %arg1, %c0_i32 : i32
    %41 = arith.extui %40 : i1 to i32
    %c0_i32_11 = arith.constant 0 : i32
    %42 = arith.cmpi ne, %41, %c0_i32_11 : i32
    scf.if %42 {
      %c0_14 = arith.constant 0 : index
      %c0_15 = arith.constant 0 : index
      %c0_16 = arith.constant 0 : index
      %46 = vector.load %arg4[%c0_14, %c0_15, %c0_16] : memref<1x4x128xf32, #tpu.memory_space<vmem>>, vector<1x4x128xf32>
      %47 = vector.shape_cast %46 : vector<1x4x128xf32> to vector<4x128xf32>
      %48 = vector.shape_cast %29 : vector<4x128xf32> to vector<1x4x128xf32>
      tpu.vector_store %arg4[%c0_14, %c0_15, %c0_16], %48 {strides = array<i32>} : memref<1x4x128xf32, #tpu.memory_space<vmem>>, vector<1x4x128xf32>,
      %c0_17 = arith.constant 0 : index
      %c0_18 = arith.constant 0 : index
      %c0_19 = arith.constant 0 : index
      %49 = vector.load %arg5[%c0_17, %c0_18, %c0_19] : memref<1x4x128xf32, #tpu.memory_space<vmem>>, vector<1x4x128xf32>
      %50 = vector.shape_cast %49 : vector<1x4x128xf32> to vector<4x128xf32>
      %51 = vector.shape_cast %33 : vector<4x128xf32> to vector<1x4x128xf32>
      tpu.vector_store %arg5[%c0_17, %c0_18, %c0_19], %51 {strides = array<i32>} : memref<1x4x128xf32, #tpu.memory_space<vmem>>, vector<1x4x128xf32>,
      %c0_20 = arith.constant 0 : index
      %c0_21 = arith.constant 0 : index
      %c0_22 = arith.constant 0 : index
      %52 = vector.load %arg6[%c0_20, %c0_21, %c0_22] : memref<1x4x128xf32, #tpu.memory_space<vmem>>, vector<1x4x128xf32>
      %53 = vector.shape_cast %52 : vector<1x4x128xf32> to vector<4x128xf32>
      %54 = vector.shape_cast %39 : vector<4x128xf32> to vector<1x4x128xf32>
      tpu.vector_store %arg6[%c0_20, %c0_21, %c0_22], %54 {strides = array<i32>} : memref<1x4x128xf32, #tpu.memory_space<vmem>>, vector<1x4x128xf32>,
    } else {
    }
    %c0_i32_12 = arith.constant 0 : i32
    %43 = arith.cmpi sgt, %arg1, %c0_i32_12 : i32
    %44 = arith.extui %43 : i1 to i32
    %c0_i32_13 = arith.constant 0 : i32
    %45 = arith.cmpi ne, %44, %c0_i32_13 : i32
    scf.if %45 {
      %c0_14 = arith.constant 0 : index
      %c0_15 = arith.constant 0 : index
      %c0_16 = arith.constant 0 : index
      %46 = vector.load %arg4[%c0_14, %c0_15, %c0_16] : memref<1x4x128xf32, #tpu.memory_space<vmem>>, vector<1x4x128xf32>
      %47 = vector.shape_cast %46 : vector<1x4x128xf32> to vector<4x128xf32>
      %48 = arith.addf %47, %29 : vector<4x128xf32>
      %c0_17 = arith.constant 0 : index
      %c0_18 = arith.constant 0 : index
      %c0_19 = arith.constant 0 : index
      %49 = vector.load %arg4[%c0_17, %c0_18, %c0_19] : memref<1x4x128xf32, #tpu.memory_space<vmem>>, vector<1x4x128xf32>
      %50 = vector.shape_cast %49 : vector<1x4x128xf32> to vector<4x128xf32>
      %51 = vector.shape_cast %48 : vector<4x128xf32> to vector<1x4x128xf32>
      tpu.vector_store %arg4[%c0_17, %c0_18, %c0_19], %51 {strides = array<i32>} : memref<1x4x128xf32, #tpu.memory_space<vmem>>, vector<1x4x128xf32>,
      %c0_20 = arith.constant 0 : index
      %c0_21 = arith.constant 0 : index
      %c0_22 = arith.constant 0 : index
      %52 = vector.load %arg5[%c0_20, %c0_21, %c0_22] : memref<1x4x128xf32, #tpu.memory_space<vmem>>, vector<1x4x128xf32>
      %53 = vector.shape_cast %52 : vector<1x4x128xf32> to vector<4x128xf32>
      %54 = arith.addf %53, %33 : vector<4x128xf32>
      %c0_23 = arith.constant 0 : index
      %c0_24 = arith.constant 0 : index
      %c0_25 = arith.constant 0 : index
      %55 = vector.load %arg5[%c0_23, %c0_24, %c0_25] : memref<1x4x128xf32, #tpu.memory_space<vmem>>, vector<1x4x128xf32>
      %56 = vector.shape_cast %55 : vector<1x4x128xf32> to vector<4x128xf32>
      %57 = vector.shape_cast %54 : vector<4x128xf32> to vector<1x4x128xf32>
      tpu.vector_store %arg5[%c0_23, %c0_24, %c0_25], %57 {strides = array<i32>} : memref<1x4x128xf32, #tpu.memory_space<vmem>>, vector<1x4x128xf32>,
      %c0_26 = arith.constant 0 : index
      %c0_27 = arith.constant 0 : index
      %c0_28 = arith.constant 0 : index
      %58 = vector.load %arg6[%c0_26, %c0_27, %c0_28] : memref<1x4x128xf32, #tpu.memory_space<vmem>>, vector<1x4x128xf32>
      %59 = vector.shape_cast %58 : vector<1x4x128xf32> to vector<4x128xf32>
      %60 = arith.addf %59, %39 : vector<4x128xf32>
      %c0_29 = arith.constant 0 : index
      %c0_30 = arith.constant 0 : index
      %c0_31 = arith.constant 0 : index
      %61 = vector.load %arg6[%c0_29, %c0_30, %c0_31] : memref<1x4x128xf32, #tpu.memory_space<vmem>>, vector<1x4x128xf32>
      %62 = vector.shape_cast %61 : vector<1x4x128xf32> to vector<4x128xf32>
      %63 = vector.shape_cast %60 : vector<4x128xf32> to vector<1x4x128xf32>
      tpu.vector_store %arg6[%c0_29, %c0_30, %c0_31], %63 {strides = array<i32>} : memref<1x4x128xf32, #tpu.memory_space<vmem>>, vector<1x4x128xf32>,
    } else {
    }
    return
  }
  func.func @transform_0(%arg0: i32, %arg1: i32) -> (i32, i32, i32) {
    %c0_i32 = arith.constant 0 : i32
    %c0_i32_0 = arith.constant 0 : i32
    return %arg0, %c0_i32, %arg1 : i32, i32, i32
  }
  func.func @transform_1(%arg0: i32, %arg1: i32) -> (i32, i32, i32) {
    %c0_i32 = arith.constant 0 : i32
    %c0_i32_0 = arith.constant 0 : i32
    return %arg0, %c0_i32, %arg1 : i32, i32, i32
  }
  func.func @transform_2(%arg0: i32, %arg1: i32) -> (i32, i32, i32) {
    %c0_i32 = arith.constant 0 : i32
    %c0_i32_0 = arith.constant 0 : i32
    %c0_i32_1 = arith.constant 0 : i32
    return %arg0, %c0_i32, %c0_i32_0 : i32, i32, i32
  }
  func.func @transform_3(%arg0: i32, %arg1: i32) -> (i32, i32, i32) {
    %c0_i32 = arith.constant 0 : i32
    %c0_i32_0 = arith.constant 0 : i32
    %c0_i32_1 = arith.constant 0 : i32
    return %arg0, %c0_i32, %c0_i32_0 : i32, i32, i32
  }
  func.func @transform_4(%arg0: i32, %arg1: i32) -> (i32, i32, i32) {
    %c0_i32 = arith.constant 0 : i32
    %c0_i32_0 = arith.constant 0 : i32
    %c0_i32_1 = arith.constant 0 : i32
    return %arg0, %c0_i32, %c0_i32_0 : i32, i32, i32
  }
}

</mosaic_0001>

<llo_original>
// kernel: tpu_custom_call.1
$region0: #{tpu_custom_call.1}
  #allocation0 [shape = 'u32[]', space=smem, size = 0x4, offset = 0x4, fixed_abs, tag = 'smem constant byte address 0x4 - core index']
  #allocation1 [shape = 'u32[144,128]{1,0:T(1,128)}', space=vmem, size = 0x12000, scoped, tag = 'internal scratch']
  %s0 = inlined_call_operand.hbm [shape: f32[2,4,256], index: 0, kind: input, shape index: {}]
  %s1 = inlined_call_operand.hbm [shape: s32[2,1,256], index: 1, kind: input, shape index: {}]
  %s2 = inlined_call_operand.hbm [shape: f32[2,4,128], index: 2, kind: output, shape index: {0}]
  %s3 = inlined_call_operand.hbm [shape: f32[2,4,128], index: 3, kind: output, shape index: {1}]
  %s4 = inlined_call_operand.hbm [shape: f32[2,4,128], index: 4, kind: output, shape index: {2}]
  %5 = xla_tuple %s2, %s3, %s4
  %s6 = sld [smem:[#allocation0]]
  $region73: #{tpu_custom_call.1} parent=0
    _
  %s8 = ssub.s32 1, %s6
  %s9 = scalar_select 0, %s8, %s6
  $region1: #{tpu_custom_call.1} parent=0
    #allocation2 [shape = 'u8[8192]{0}', space=vmem, size = 0x2000, scoped, tag = 'input window, operand 0']
    #allocation3 [shape = 's32[2]{0}', space=sflag, size = 0x8, scoped, tag = 'scoped memory for tpu_custom_call.1']
    #allocation4 [shape = 's32[2]{0}', space=sflag, size = 0x8, scoped, tag = 'scoped memory for tpu_custom_call.1']
    #allocation5 [shape = 'u8[2048]{0}', space=vmem, size = 0x800, scoped, tag = 'input window, operand 1']
    #allocation6 [shape = 's32[2]{0}', space=sflag, size = 0x8, scoped, tag = 'scoped memory for tpu_custom_call.1']
    #allocation7 [shape = 'u8[4096]{0}', space=vmem, size = 0x1000, scoped, tag = 'output window, operand 0']
    #allocation8 [shape = 'u8[4096]{0}', space=vmem, size = 0x1000, scoped, tag = 'output window, operand 1']
    #allocation9 [shape = 's32[2]{0}', space=sflag, size = 0x8, scoped, tag = 'scoped memory for tpu_custom_call.1']
    #allocation10 [shape = 'u8[4096]{0}', space=vmem, size = 0x1000, scoped, tag = 'output window, operand 2']
    %10 = vsyncpa [#allocation3], 0
    %s11 = scalar_lea.sflag [#allocation3], 1
    %12 = vsyncpa %s11, 0
    %13 = vsyncpa [#allocation6], 0
    %s14 = scalar_lea.sflag [#allocation6], 1
    %15 = vsyncpa %s14, 0
    %16 = vsyncpa [#allocation4], 0
    %s17 = scalar_lea.sflag [#allocation4], 1
    %18 = vsyncpa %s17, 0
    %19 = vsyncpa [#allocation9], 0
    %s20 = scalar_lea.sflag [#allocation9], 1
    %21 = vsyncpa %s20, 0
    loop: start=0, step=1, limit=4
    $region2: #{tpu_custom_call.1} parent=1 // loop_pre_header
      _
    $region3: #{tpu_custom_call.1} parent=1 // loop_header
      %s23 = sphi 0, %s27
      %p24 = scmp.ge.s32.totalorder %s23, 4
      %s30 = sphi 0, %s42
      %s31 = sphi 0, %s38
      %s32 = sphi 0, %s30
      %s33 = sphi 0, %s31
      %s34 = sphi 0, %s32
      %s35 = sphi 0, %s33
      %s47 = sphi 0, %s49
      %s50 = sphi 0, %s47
      %s51 = sphi 0, %s50
      %s67 = sphi 0, %s51
      %s75 = sphi 0, %s77
      %s78 = sphi 0, %s75
      %s79 = sphi 0, %s78
      %s95 = sphi 0, %s79
      %s101 = sphi 0, %s103
      %s104 = sphi 0, %s101
      %s105 = sphi 0, %s104
      %s121 = sphi 0, %s105
      %s127 = sphi 0, %s129
      %s130 = sphi 0, %s127
      %s131 = sphi 0, %s130
      %s147 = sphi 0, %s131
      %s153 = sphi 0, %s155
      %s156 = sphi 0, %s153
      %s157 = sphi 0, %s156
      %s173 = sphi 0, %s157
    $region4: #{tpu_custom_call.1} parent=1 // loop_header_branch
      %26 = sbr.rel (%p24) target = $region8
    $region5: #{tpu_custom_call.1} parent=1 // loop_body
      %s28 = ssub.s32 %s23, 1
      %s29 = ssub.s32 %s23, 2
      %s36 = sadd.s32 1, %s31
      %p37 = scmp.ge.s32.totalorder %s36, 1
      %s38 = scalar_select %p37, 0, %s36
      %s39 = sadd.s32 1, %s30
      %s40 = scalar_select %p37, %s39, %s30
      %p41 = scmp.ge.s32.totalorder %s40, 2
      %s42 = scalar_select %p41, 0, %s40
      %s43 = ssub.s32 %s30, %s42
      %s44 = ssub.s32 %s31, %s38
      %s45 = sor.u32 %s43, %s44
      %p46 = scmp.eq.s32.totalorder %s45, 0
      %s48 = sadd.s32 %s47, 1
      %s49 = scalar_select %p46, %s47, %s48
      %p52 = pneg %p46
      %p53 = scmp.eq.s32.totalorder %s23, 1
      %p54 = por %p52, %p53
      %p55 = scmp.ne.s32.totalorder %s47, %s50
      %p56 = scmp.eq.s32.totalorder %s23, 0
      %p57 = por %p55, %p56
      %p58 = scmp.ne.s32.totalorder %s47, %s50
      %p59 = scmp.eq.s32.totalorder %s28, 1
      %p60 = por %p58, %p59
      %p61 = scmp.ne.s32.totalorder %s50, %s51
      %p62 = scmp.eq.s32.totalorder %s28, 0
      %p63 = por %p61, %p62
      %p64 = scmp.ne.s32.totalorder %s50, %s51
      %p65 = scmp.eq.s32.totalorder %s29, 1
      %p66 = por %p64, %p65
      %p68 = scmp.ne.s32.totalorder %s51, %s67
      %p69 = scmp.eq.s32.totalorder %s29, 0
      %p70 = por %p68, %p69
      %s71 = ssub.s32 %s30, %s42
      %s72 = ssub.s32 %s31, %s38
      %s73 = sor.u32 %s71, %s72
      %p74 = scmp.eq.s32.totalorder %s73, 0
      %s76 = sadd.s32 %s75, 1
      %s77 = scalar_select %p74, %s75, %s76
      %p80 = pneg %p74
      %p81 = scmp.eq.s32.totalorder %s23, 1
      %p82 = por %p80, %p81
      %p83 = scmp.ne.s32.totalorder %s75, %s78
      %p84 = scmp.eq.s32.totalorder %s23, 0
      %p85 = por %p83, %p84
      %p86 = scmp.ne.s32.totalorder %s75, %s78
      %p87 = scmp.eq.s32.totalorder %s28, 1
      %p88 = por %p86, %p87
      %p89 = scmp.ne.s32.totalorder %s78, %s79
      %p90 = scmp.eq.s32.totalorder %s28, 0
      %p91 = por %p89, %p90
      %p92 = scmp.ne.s32.totalorder %s78, %s79
      %p93 = scmp.eq.s32.totalorder %s29, 1
      %p94 = por %p92, %p93
      %p96 = scmp.ne.s32.totalorder %s79, %s95
      %p97 = scmp.eq.s32.totalorder %s29, 0
      %p98 = por %p96, %p97
      %s99 = ssub.s32 %s30, %s42
      %p100 = scmp.eq.s32.totalorder %s99, 0
      %s102 = sadd.s32 %s101, 1
      %s103 = scalar_select %p100, %s101, %s102
      %p106 = pneg %p100
      %p107 = scmp.eq.s32.totalorder %s23, 1
      %p108 = por %p106, %p107
      %p109 = scmp.ne.s32.totalorder %s101, %s104
      %p110 = scmp.eq.s32.totalorder %s23, 0
      %p111 = por %p109, %p110
      %p112 = scmp.ne.s32.totalorder %s101, %s104
      %p113 = scmp.eq.s32.totalorder %s28, 1
      %p114 = por %p112, %p113
      %p115 = scmp.ne.s32.totalorder %s104, %s105
      %p116 = scmp.eq.s32.totalorder %s28, 0
      %p117 = por %p115, %p116
      %p118 = scmp.ne.s32.totalorder %s104, %s105
      %p119 = scmp.eq.s32.totalorder %s29, 1
      %p120 = por %p118, %p119
      %p122 = scmp.ne.s32.totalorder %s105, %s121
      %p123 = scmp.eq.s32.totalorder %s29, 0
      %p124 = por %p122, %p123
      %s125 = ssub.s32 %s30, %s42
      %p126 = scmp.eq.s32.totalorder %s125, 0
      %s128 = sadd.s32 %s127, 1
      %s129 = scalar_select %p126, %s127, %s128
      %p132 = pneg %p126
      %p133 = scmp.eq.s32.totalorder %s23, 1
      %p134 = por %p132, %p133
      %p135 = scmp.ne.s32.totalorder %s127, %s130
      %p136 = scmp.eq.s32.totalorder %s23, 0
      %p137 = por %p135, %p136
      %p138 = scmp.ne.s32.totalorder %s127, %s130
      %p139 = scmp.eq.s32.totalorder %s28, 1
      %p140 = por %p138, %p139
      %p141 = scmp.ne.s32.totalorder %s130, %s131
      %p142 = scmp.eq.s32.totalorder %s28, 0
      %p143 = por %p141, %p142
      %p144 = scmp.ne.s32.totalorder %s130, %s131
      %p145 = scmp.eq.s32.totalorder %s29, 1
      %p146 = por %p144, %p145
      %p148 = scmp.ne.s32.totalorder %s131, %s147
      %p149 = scmp.eq.s32.totalorder %s29, 0
      %p150 = por %p148, %p149
      %s151 = ssub.s32 %s30, %s42
      %p152 = scmp.eq.s32.totalorder %s151, 0
      %s154 = sadd.s32 %s153, 1
      %s155 = scalar_select %p152, %s153, %s154
      %p158 = pneg %p152
      %p159 = scmp.eq.s32.totalorder %s23, 1
      %p160 = por %p158, %p159
      %p161 = scmp.ne.s32.totalorder %s153, %s156
      %p162 = scmp.eq.s32.totalorder %s23, 0
      %p163 = por %p161, %p162
      %p164 = scmp.ne.s32.totalorder %s153, %s156
      %p165 = scmp.eq.s32.totalorder %s28, 1
      %p166 = por %p164, %p165
      %p167 = scmp.ne.s32.totalorder %s156, %s157
      %p168 = scmp.eq.s32.totalorder %s28, 0
      %p169 = por %p167, %p168
      %p170 = scmp.ne.s32.totalorder %s156, %s157
      %p171 = scmp.eq.s32.totalorder %s29, 1
      %p172 = por %p170, %p171
      %p174 = scmp.ne.s32.totalorder %s157, %s173
      %p175 = scmp.eq.s32.totalorder %s29, 0
      %p176 = por %p174, %p175
      %p177 = scmp.le.s32.totalorder 1, %s23
      %p178 = scmp.lt.s32.totalorder %s23, 3
      %p179 = pnand %p177, %p178
      %p180 = pneg %p179
      // Predicated region
      $region9: #{tpu_custom_call.1} parent=5 // pred_check
        _
      $region10: #{tpu_custom_call.1} parent=5 // pred_check_branch
        %182 = sbr.rel (%p179) target = $region12
      $region11: #{tpu_custom_call.1} parent=5 // pred_region
        %s183 = ssub.s32 %s23, 1
      $region12: #{tpu_custom_call.1} parent=5 // pred_fallthru
        _
      %p184 = scmp.lt.s32.totalorder %s23, 2
      // Predicated region
      $region13: #{tpu_custom_call.1} parent=5 // pred_check
        %p185 = pneg %p184
      $region14: #{tpu_custom_call.1} parent=5 // pred_check_branch
        %187 = sbr.rel (%p185) target = $region16
      $region15: #{tpu_custom_call.1} parent=5 // pred_region
        // Predicated region
        $region17: #{tpu_custom_call.1} parent=15 // pred_check
          %p188 = pneg %p57
        $region18: #{tpu_custom_call.1} parent=15 // pred_check_branch
          %190 = sbr.rel (%p188) target = $region20
        $region19: #{tpu_custom_call.1} parent=15 // pred_region
          %s191 = sand.u32 %s47, 1
          %s192 = scalar_lea.sflag [#allocation3], %s191
          %s193 = sand.u32 %s47, 1
          %s194 = smul.addr %s193, 8
          %s195 = scalar_lea.vmem [#allocation2], %s194
          %s196 = smul.u32 2, %s31
          %s198 = ssub.s32 128, 128
          %199 = vsyncadd %s192, %s198
          %s200 = smul.addr %s30, 2
          %s201 = sadd.s32 %s196, %s200
          %s202 = smul.addr %s201, 64
          %s203 = scalar_lea.hbm %s0, %s202
          %s205 = sshll.u32 %s195, 4
          %s206 = int_to_ptr.vmem [resolvable:$true] %s205
          %208 = dma.hbm_to_vmem [thread:$0]  %s203, 128, %s206, %s192
        $region20: #{tpu_custom_call.1} parent=15 // pred_fallthru
          _
        // Predicated region
        $region21: #{tpu_custom_call.1} parent=15 // pred_check
          %p209 = pneg %p85
        $region22: #{tpu_custom_call.1} parent=15 // pred_check_branch
          %211 = sbr.rel (%p209) target = $region24
        $region23: #{tpu_custom_call.1} parent=15 // pred_region
          %s212 = sand.u32 %s75, 1
          %s213 = scalar_lea.sflag [#allocation6], %s212
          %s214 = sand.u32 %s75, 1
          %s215 = smul.addr %s214, 2
          %s216 = scalar_lea.vmem [#allocation5], %s215
          %s217 = smul.u32 2, %s31
          %s219 = ssub.s32 32, 32
          %220 = vsyncadd %s213, %s219
          %s221 = smul.addr %s30, 2
          %s222 = sadd.s32 %s217, %s221
          %s223 = smul.addr %s222, 16
          %s224 = scalar_lea.hbm %s1, %s223
          %s226 = sshll.u32 %s216, 4
          %s227 = int_to_ptr.vmem [resolvable:$true] %s226
          %229 = dma.hbm_to_vmem [thread:$0]  %s224, 32, %s227, %s213
        $region24: #{tpu_custom_call.1} parent=15 // pred_fallthru
          _
      $region16: #{tpu_custom_call.1} parent=5 // pred_fallthru
        _
      %p230 = scmp.le.s32.totalorder 1, %s23
      %p231 = scmp.lt.s32.totalorder %s23, 3
      %p232 = pnand %p230, %p231
      %p233 = pneg %p232
      // Predicated region
      $region25: #{tpu_custom_call.1} parent=5 // pred_check
        _
      $region26: #{tpu_custom_call.1} parent=5 // pred_check_branch
        %235 = sbr.rel (%p232) target = $region28
      $region27: #{tpu_custom_call.1} parent=5 // pred_region
        %s236 = ssub.s32 %s23, 1
        %s237 = sand.u32 %s50, 1
        %s238 = scalar_lea.sflag [#allocation3], %s237
        %s239 = sand.u32 %s50, 1
        %s240 = smul.addr %s239, 8
        %s241 = scalar_lea.vmem [#allocation2], %s240
        // Predicated region
        $region29: #{tpu_custom_call.1} parent=27 // pred_check
          %p242 = pneg %p63
        $region30: #{tpu_custom_call.1} parent=27 // pred_check_branch
          %244 = sbr.rel (%p242) target = $region32
        $region31: #{tpu_custom_call.1} parent=27 // pred_region
          %245 = dma.done %s238, 128
        $region32: #{tpu_custom_call.1} parent=27 // pred_fallthru
          _
        %s246 = sand.u32 %s78, 1
        %s247 = scalar_lea.sflag [#allocation6], %s246
        %s248 = sand.u32 %s78, 1
        %s249 = smul.addr %s248, 2
        %s250 = scalar_lea.vmem [#allocation5], %s249
        // Predicated region
        $region33: #{tpu_custom_call.1} parent=27 // pred_check
          %p251 = pneg %p91
        $region34: #{tpu_custom_call.1} parent=27 // pred_check_branch
          %253 = sbr.rel (%p251) target = $region36
        $region35: #{tpu_custom_call.1} parent=27 // pred_region
          %254 = dma.done %s247, 32
        $region36: #{tpu_custom_call.1} parent=27 // pred_fallthru
          _
        %s255 = sand.u32 %s50, 1
        %s256 = scalar_lea.sflag [#allocation3], %s255
        %s257 = sand.u32 %s50, 1
        %s258 = smul.addr %s257, 8
        %s259 = scalar_lea.vmem [#allocation2], %s258
        %p260 = pneg %p63
        %p261 = pneg %p60
        %s262 = sand.u32 %s78, 1
        %s263 = scalar_lea.sflag [#allocation6], %s262
        %s264 = sand.u32 %s78, 1
        %s265 = smul.addr %s264, 2
        %s266 = scalar_lea.vmem [#allocation5], %s265
        %p267 = pneg %p91
        %p268 = pneg %p88
        %p269 = pneg %p117
        %p270 = pneg %p114
        %s271 = sand.u32 %s104, 1
        %s272 = scalar_lea.sflag [#allocation4], %s271
        %s273 = sand.u32 %s104, 1
        %s274 = smul.addr %s273, 4
        %s275 = scalar_lea.vmem [#allocation7], %s274
        %p276 = pneg %p143
        %p277 = pneg %p140
        %s278 = sand.u32 %s28, 1
        %s279 = scalar_lea.sflag [#allocation9], %s278
        %s280 = sand.u32 %s130, 1
        %s281 = smul.addr %s280, 4
        %s282 = scalar_lea.vmem [#allocation8], %s281
        %p283 = pneg %p169
        %p284 = pneg %p166
        %s285 = sand.u32 %s28, 1
        %s286 = scalar_lea.sflag [#allocation9], %s285
        %s287 = sand.u32 %s156, 1
        %s288 = smul.addr %s287, 4
        %s289 = scalar_lea.vmem [#allocation10], %s288
        %s290 = smul.u32 2, %s33
        %s291 = smul.u32 2, %s33
        %v292 = vld [vmem:[%s241] sm:$0xff]
        %v293 = vld [vmem:[%s250] sm:$0x3]
        %v295 = vcombine.high %v292, %v292
        %vm297 = vcmask 1043456
        %v298 = vsel %vm297, %v292, -inf
        %v299 = vrot.slane %v298, 4
        %v300 = vmax.f32 %v298, %v299
        %v301 = vrot.slane %v300, 2
        %v302 = vmax.f32 %v300, %v301
        %v303 = vrot.slane %v302, 1
        %v304 = vmax.f32 %v302, %v303
        %v305 = vsel %vm297, %v295, -inf
        %v306 = vrot.slane %v305, 4
        %v307 = vmax.f32 %v305, %v306
        %v308 = vrot.slane %v307, 2
        %v309 = vmax.f32 %v307, %v308
        %v310 = vrot.slane %v309, 1
        %v311 = vmax.f32 %v309, %v310
        %v314 = vcombine.low %v304, %v311
        %v316 = vsub.f32 %v292, %v314
        %v317 = vmul.f32 %v316, 1.442695
        %v318 = vpow.pop %v317
        %v320 = vcombine.high %v318, %v318
        %v322 = vsel %vm297, %v318, 0.0
        %v323 = vrot.slane %v322, 4
        %v324 = vadd.f32 %v322, %v323
        %v325 = vrot.slane %v324, 2
        %v326 = vadd.f32 %v324, %v325
        %v327 = vrot.slane %v326, 1
        %v328 = vadd.f32 %v326, %v327
        %v329 = vsel %vm297, %v320, 0.0
        %v330 = vrot.slane %v329, 4
        %v331 = vadd.f32 %v329, %v330
        %v332 = vrot.slane %v331, 2
        %v333 = vadd.f32 %v331, %v332
        %v334 = vrot.slane %v333, 1
        %v335 = vadd.f32 %v333, %v334
        %v336 = vrcp.pop %v328
        %v337 = vrcp.pop %v335
        %v338 = vmul.f32 %v328, %v336
        %v339 = vmul.f32 %v335, %v337
        %v340 = vsub.f32 2.0, %v338
        %v341 = vsub.f32 2.0, %v339
        %v342 = vmul.f32 %v336, %v340
        %v343 = vmul.f32 %v337, %v341
        %v346 = vcombine.low %v342, %v343
        %v348 = vmul.f32 %v318, %v346
        %v349 = vlaneseq
        %v350 = vshrl.u32 %v349, 7
        %v351 = vlaneseq
        %v352 = vshrl.u32 %v351, 7
        %v353 = vsub.s32 0, %v352
        %v354 = vrot.slane %v293, %v353
        %v355 = vlaneseq
        %v356 = vshrl.u32 %v355, 7
        %v357 = vsub.s32 1, %v356
        %v358 = vrot.slane %v293, %v357
        %vm359 = vcmp.eq.s32.totalorder %v350, %v354
        %vm360 = vcmp.eq.s32.totalorder %v350, %v358
        %v362 = vcombine.high %v348, %v348
        %v364 = vsel %vm359, %v348, 0.0
        %v365 = vsel %vm360, %v362, 0.0
        %v366 = vadd.f32 %v364, %v365
        %v367 = vadd.f32 %v366, 0.0
        %v368 = vrot.slane %v348, 4
        %v370 = vadd.f32 %v348, %v368
        %v371 = vadd.f32 %v370, 0.0
        %v372 = vsel %vm359, 1, 0
        %v373 = vsel %vm360, 1, 0
        %v374 = vcvt.s32.f32 %v372
        %v375 = vcvt.s32.f32 %v373
        %v376 = vadd.f32 %v374, %v375
        %v377 = vadd.f32 %v376, 0.0
        %p378 = scmp.eq.s32.totalorder %s33, 0
        // Predicated region
        $region37: #{tpu_custom_call.1} parent=27 // pred_check
          %p379 = pneg %p378
        $region38: #{tpu_custom_call.1} parent=27 // pred_check_branch
          %381 = sbr.rel (%p379) target = $region40
        $region39: #{tpu_custom_call.1} parent=27 // pred_region
          %382 = vst [vmem:[%s275] sm:$0xf] %v367
          %383 = vst [vmem:[%s282] sm:$0xf] %v371
          %384 = vst [vmem:[%s289] sm:$0xf] %v377
        $region40: #{tpu_custom_call.1} parent=27 // pred_fallthru
          _
        %p385 = scmp.gt.s32.totalorder %s33, 0
        // Predicated region
        $region41: #{tpu_custom_call.1} parent=27 // pred_check
          %p386 = pneg %p385
        $region42: #{tpu_custom_call.1} parent=27 // pred_check_branch
          %388 = sbr.rel (%p386) target = $region44
        $region43: #{tpu_custom_call.1} parent=27 // pred_region
          %v389 = vld [vmem:[%s275] sm:$0xf]
          %v390 = vadd.f32 %v389, %v367
          %391 = vst [vmem:[%s275] sm:$0xf] %v390
          %v392 = vld [vmem:[%s282] sm:$0xf]
          %v393 = vadd.f32 %v392, %v371
          %394 = vst [vmem:[%s282] sm:$0xf] %v393
          %v395 = vld [vmem:[%s289] sm:$0xf]
          %v396 = vadd.f32 %v395, %v377
          %397 = vst [vmem:[%s289] sm:$0xf] %v396
        $region44: #{tpu_custom_call.1} parent=27 // pred_fallthru
          _
        %s398 = sand.u32 %s104, 1
        %s399 = scalar_lea.sflag [#allocation4], %s398
        %s400 = sand.u32 %s104, 1
        %s401 = smul.addr %s400, 4
        %s402 = scalar_lea.vmem [#allocation7], %s401
        %s403 = sand.u32 %s28, 1
        %s404 = scalar_lea.sflag [#allocation9], %s403
        %s405 = sand.u32 %s130, 1
        %s406 = smul.addr %s405, 4
        %s407 = scalar_lea.vmem [#allocation8], %s406
        %s408 = sand.u32 %s28, 1
        %s409 = scalar_lea.sflag [#allocation9], %s408
        %s410 = sand.u32 %s156, 1
        %s411 = smul.addr %s410, 4
        %s412 = scalar_lea.vmem [#allocation10], %s411
        // Predicated region
        $region45: #{tpu_custom_call.1} parent=27 // pred_check
          %p413 = pneg %p114
        $region46: #{tpu_custom_call.1} parent=27 // pred_check_branch
          %415 = sbr.rel (%p413) target = $region48
        $region47: #{tpu_custom_call.1} parent=27 // pred_region
          %s417 = ssub.s32 64, 64
          %418 = vsyncadd %s399, %s417
          %s419 = smul.addr %s32, 64
          %s420 = scalar_lea.hbm %s2, %s419
          %s422 = sshll.u32 %s402, 4
          %s423 = int_to_ptr.vmem [resolvable:$true] %s422
          %425 = dma.vmem_to_hbm [thread:$0]  %s423, 64, %s420, %s399
        $region48: #{tpu_custom_call.1} parent=27 // pred_fallthru
          _
        // Predicated region
        $region49: #{tpu_custom_call.1} parent=27 // pred_check
          %p426 = pneg %p140
        $region50: #{tpu_custom_call.1} parent=27 // pred_check_branch
          %428 = sbr.rel (%p426) target = $region52
        $region51: #{tpu_custom_call.1} parent=27 // pred_region
          %s430 = ssub.s32 64, 64
          %431 = vsyncadd %s404, %s430
          %s432 = smul.addr %s32, 64
          %s433 = scalar_lea.hbm %s3, %s432
          %s435 = sshll.u32 %s407, 4
          %s436 = int_to_ptr.vmem [resolvable:$true] %s435
          %438 = dma.vmem_to_hbm [thread:$0]  %s436, 64, %s433, %s404
        $region52: #{tpu_custom_call.1} parent=27 // pred_fallthru
          _
        // Predicated region
        $region53: #{tpu_custom_call.1} parent=27 // pred_check
          %p439 = pneg %p166
        $region54: #{tpu_custom_call.1} parent=27 // pred_check_branch
          %441 = sbr.rel (%p439) target = $region56
        $region55: #{tpu_custom_call.1} parent=27 // pred_region
          %s443 = ssub.s32 64, 64
          %444 = vsyncadd %s409, %s443
          %s445 = smul.addr %s32, 64
          %s446 = scalar_lea.hbm %s4, %s445
          %s448 = sshll.u32 %s412, 4
          %s449 = int_to_ptr.vmem [resolvable:$true] %s448
          %451 = dma.vmem_to_hbm [thread:$0]  %s449, 64, %s446, %s409
        $region56: #{tpu_custom_call.1} parent=27 // pred_fallthru
          _
      $region28: #{tpu_custom_call.1} parent=5 // pred_fallthru
        _
      %p452 = scmp.le.s32.totalorder 2, %s23
      // Predicated region
      $region57: #{tpu_custom_call.1} parent=5 // pred_check
        %p453 = pneg %p452
      $region58: #{tpu_custom_call.1} parent=5 // pred_check_branch
        %455 = sbr.rel (%p453) target = $region60
      $region59: #{tpu_custom_call.1} parent=5 // pred_region
        %s456 = ssub.s32 %s23, 2
        // Predicated region
        $region61: #{tpu_custom_call.1} parent=59 // pred_check
          %p457 = pneg %p120
        $region62: #{tpu_custom_call.1} parent=59 // pred_check_branch
          %459 = sbr.rel (%p457) target = $region64
        $region63: #{tpu_custom_call.1} parent=59 // pred_region
          %s460 = sand.u32 %s105, 1
          %s461 = scalar_lea.sflag [#allocation4], %s460
          %s462 = sand.u32 %s105, 1
          %s463 = smul.addr %s462, 4
          %s464 = scalar_lea.vmem [#allocation7], %s463
          %465 = dma.done %s461, 64
        $region64: #{tpu_custom_call.1} parent=59 // pred_fallthru
          _
        // Predicated region
        $region65: #{tpu_custom_call.1} parent=59 // pred_check
          %p466 = pneg %p146
        $region66: #{tpu_custom_call.1} parent=59 // pred_check_branch
          %468 = sbr.rel (%p466) target = $region68
        $region67: #{tpu_custom_call.1} parent=59 // pred_region
          %s469 = sand.u32 %s29, 1
          %s470 = scalar_lea.sflag [#allocation9], %s469
          %s471 = sand.u32 %s131, 1
          %s472 = smul.addr %s471, 4
          %s473 = scalar_lea.vmem [#allocation8], %s472
          %474 = dma.done %s470, 64
        $region68: #{tpu_custom_call.1} parent=59 // pred_fallthru
          _
        // Predicated region
        $region69: #{tpu_custom_call.1} parent=59 // pred_check
          %p475 = pneg %p172
        $region70: #{tpu_custom_call.1} parent=59 // pred_check_branch
          %477 = sbr.rel (%p475) target = $region72
        $region71: #{tpu_custom_call.1} parent=59 // pred_region
          %s478 = sand.u32 %s29, 1
          %s479 = scalar_lea.sflag [#allocation9], %s478
          %s480 = sand.u32 %s157, 1
          %s481 = smul.addr %s480, 4
          %s482 = scalar_lea.vmem [#allocation10], %s481
          %483 = dma.done %s479, 64
        $region72: #{tpu_custom_call.1} parent=59 // pred_fallthru
          _
      $region60: #{tpu_custom_call.1} parent=5 // pred_fallthru
        _
    $region6: #{tpu_custom_call.1} parent=1 // loop_footer
      %s27 = sadd.s32 1, %s23
    $region7: #{tpu_custom_call.1} parent=1 // loop_footer_branch
      %22 = sbr.rel target = $region3
    $region8: #{tpu_custom_call.1} parent=1 // loop_exit
      _
    %484 = vsyncpa [#allocation3], 1
    %s485 = scalar_lea.sflag [#allocation3], 1
    %486 = vsyncpa %s485, 1
    %487 = vsyncpa [#allocation6], 1
    %s488 = scalar_lea.sflag [#allocation6], 1
    %489 = vsyncpa %s488, 1
    %490 = vsyncpa [#allocation4], 1
    %s491 = scalar_lea.sflag [#allocation4], 1
    %492 = vsyncpa %s491, 1
    %493 = vsyncpa [#allocation9], 1
    %s494 = scalar_lea.sflag [#allocation9], 1
    %495 = vsyncpa %s494, 1

</llo_original>
